<compile_context>
chip_gen: v7x
topology: tpu7x:2x2x1
jax: 0.10.0
libtpu: 0.0.40
codegen_flags: <defaults>
</compile_context>

<pallas_src>
import functools

import jax
import jax.numpy as jnp
from jax.experimental import pallas as pl
from jax.experimental.pallas import tpu as pltpu


def _round_up(n, m):
    return (n + m - 1) // m * m


def _pad_to(a, shape):
    return jnp.pad(a, [(0, t - s) for s, t in zip(a.shape, shape)])


_NEG_BIG = -1e30  # finite "-inf" used to mask padded sequence positions


# -----------------------------------------------------------------------------
# Kernel: grid = (row_tiles over batch, class_tiles). One output tile per step.
# -----------------------------------------------------------------------------
def _laat_kernel(x_ref,      # (rt, I)    row tile of flattened tokens (rt = b_tile * Sp)
                 w1_ref,     # (I, Pp)    first_linear weight (transposed, padded)
                 wh_ref,     # (Pp, Kp)   concat hierarchical branch weights
                 wf_ref,     # (Pp, ct)   full_embedding weight (P_all folded), C tile
                 ph_ref,     # (Kp, ct)   concat hierarchical perm matrices, C tile
                 bt_ref,     # (1, ct)    all branch biases pre-folded through perms
                 w3_ref,     # (I, ct)    third_linear weight (transposed), C tile
                 b3_ref,     # (1, ct)    third_linear bias, C tile
                 o_ref,      # (b_tile, ct)
                 h_sc,       # (rt, Pp)   scratch: tanh(x @ W1)
                 hier_sc,    # (rt, Kp)   scratch: h @ Wh
                 *, b_tile, seq_pad, seq_valid, matmul_dtype, approx_recip):
    # ---- C-invariant projection: once per row tile (first C-tile visit) ----
    @pl.when(pl.program_id(1) == 0)
    def _():
        xm = x_ref[...].astype(matmul_dtype)
        h = jnp.tanh(jnp.dot(xm, w1_ref[...],
                             preferred_element_type=jnp.float32))
        h_sc[...] = h.astype(matmul_dtype)
        hier_sc[...] = jnp.dot(h.astype(matmul_dtype), wh_ref[...],
                               preferred_element_type=jnp.float32
                               ).astype(matmul_dtype)

    ct = o_ref.shape[-1]

    # ---- attention logits for this class tile -------------------------------
    att = jnp.dot(h_sc[...], wf_ref[...], preferred_element_type=jnp.float32)
    att += jnp.dot(hier_sc[...], ph_ref[...], preferred_element_type=jnp.float32)
    att += bt_ref[...]

    # Softmax over the (padded) sequence axis, per batch element.
    att = att.reshape(b_tile, seq_pad, ct)
    if seq_pad != seq_valid:
        pos = jax.lax.broadcasted_iota(jnp.int32, (b_tile, seq_pad, ct), 1)
        att = jnp.where(pos < seq_valid, att, _NEG_BIG)
    m = jnp.max(att, axis=1, keepdims=True)
    e = jnp.exp(att - m)
    p = e * pl.reciprocal(jnp.sum(e, axis=1, keepdims=True), approx=approx_recip)

    # out[b, c] = sum_s p[b, s, c] * (x @ W3^T)[b, s, c] + b3[c]
    # (== third_linear.weight.mul(att^T @ x).sum(-1) + bias, but contracts over
    #  I on the MXU and reduces over S on sublanes; padded rows of x are zero
    #  and carry zero softmax weight, so they contribute nothing.)
    logits3 = jnp.dot(x_ref[...].astype(matmul_dtype), w3_ref[...],
                      preferred_element_type=jnp.float32)
    logits3 = logits3.reshape(b_tile, seq_pad, ct)
    o_ref[...] = jnp.sum(p * logits3, axis=1) + b3_ref[...]


# -----------------------------------------------------------------------------
# One-time parameter packing (call at model init / param load, NOT per forward)
# -----------------------------------------------------------------------------
def pack_laat_params(params, *, c_tile=256, matmul_dtype=jnp.bfloat16):
    """Folds perms/biases, concatenates the hierarchical branches, transposes to
    [in, out], zero-pads to lane-dense shapes and casts matmul operands.
    c_tile: 256 for v6e/v7x (fills the 256-wide MXU), 128 for v5e."""
    P, I = params["w1"].shape
    C = params["wf"].shape[0]
    Pp = _round_up(P, 128)
    Cp = _round_up(C, c_tile)

    # Fold P_all into the full-embedding branch; fold every bias through its
    # perm into one [1, C] row.  Zero-padding below keeps padded classes inert.
    wf_eff = params["pall"].T @ params["wf"]                     # [C, P]
    b_total = (params["bf"] @ params["pall"]
               + params["bl1"] @ params["pl1"]
               + params["bs"] @ params["ps"]
               + params["bc"] @ params["pc"])                    # [1, C]

    # Concatenate the three hierarchical branches into one projection + perm.
    w_h = jnp.concatenate([params["wl1"], params["ws"], params["wc"]], axis=0)
    p_h = jnp.concatenate([params["pl1"], params["ps"], params["pc"]], axis=0)
    Kp = _round_up(w_h.shape[0], 128)

    wd = matmul_dtype
    return {
        "w1_t": _pad_to(params["w1"].T, (I, Pp)).astype(wd),    # [I, Pp]
        "wh_t": _pad_to(w_h.T, (Pp, Kp)).astype(wd),             # [Pp, Kp]
        "wf_t": _pad_to(wf_eff.T, (Pp, Cp)).astype(wd),          # [Pp, Cp]
        "ph":   _pad_to(p_h, (Kp, Cp)).astype(wd),               # [Kp, Cp]
        "bt":   _pad_to(b_total, (1, Cp)).astype(jnp.float32),   # [1, Cp]
        "w3_t": _pad_to(params["w3"].T, (I, Cp)).astype(wd),     # [I, Cp]
        "b3":   _pad_to(params["b3"], (1, Cp)).astype(jnp.float32),
        "input_size": int(I), "num_classes": int(C),
        "Pp": int(Pp), "Kp": int(Kp), "Cp": int(Cp), "c_tile": int(c_tile),
    }


# -----------------------------------------------------------------------------
# Forward wrapper
# -----------------------------------------------------------------------------
def laat_forward(x, packed, *, b_tile=None, approx_recip=False):
    B, S, I = x.shape
    assert I == packed["input_size"]
    wd = packed["w1_t"].dtype
    Pp, Kp, Cp = packed["Pp"], packed["Kp"], packed["Cp"]
    C, ct = packed["num_classes"], packed["c_tile"]

    # Pad S to a multiple of 8 (padded positions masked to -inf in-kernel).
    Sp = _round_up(S, 8)
    if b_tile is None:
        b_tile = 8 if (B > 8 and B % 8 == 0) else B
    assert B % b_tile == 0 and (b_tile == B or b_tile % 8 == 0), (B, b_tile)

    rt = b_tile * Sp
    n_row = B // b_tile
    n_c = Cp // ct

    x_p = jnp.pad(x, ((0, 0), (0, Sp - S), (0, 0)))
    x2 = x_p.reshape(B * Sp, I).astype(wd)

    kernel = functools.partial(_laat_kernel, b_tile=b_tile, seq_pad=Sp,
                               seq_valid=S, matmul_dtype=wd,
                               approx_recip=approx_recip)

    isz = jnp.dtype(wd).itemsize
    # Per-step VMEM residency estimate: double-buffered pipelined blocks +
    # scratch + f32 intermediates.  Pick b_tile / c_tile so this stays well
    # under ~48 MiB on v7x (64 MiB/core); the limit below is clamped to 56 MiB.
    est = (2 * rt * I * isz                      # x row tile (2 buffers)
           + 2 * (I * Pp + Pp * Kp) * isz        # w1, wh (constant blocks)
           + 2 * (Pp + Kp + I) * ct * isz        # wf / ph / w3 C tiles
           + 2 * 2 * ct * 4                      # bt, b3
           + 2 * b_tile * ct * 4                 # output tile
           + rt * (Pp + Kp) * isz                # h / hier scratch
           + 6 * rt * ct * 4)                    # att / e / p / logits3 slack
    vmem_limit = int(min(max(est * 5 // 4, 16 << 20), 56 << 20))

    # De-duplicated work: projection once per row + per-C-tile attention work.
    flops = 2 * B * Sp * (I * Pp + Pp * Kp) + 2 * B * Sp * Cp * (Pp + Kp + I)
    transcendentals = B * Sp * (Pp + Cp)
    bytes_accessed = (x2.size * isz + (I * Pp + Pp * Kp) * isz
                      + n_row * ((Pp + Kp + I) * Cp * isz + 2 * Cp * 4)
                      + B * Cp * 4)

    out_padded = pl.pallas_call(
        kernel,
        out_shape=jax.ShapeDtypeStruct((B, Cp), jnp.float32),
        grid_spec=pltpu.PrefetchScalarGridSpec(
            num_scalar_prefetch=0,
            grid=(n_row, n_c),
            in_specs=[
                pl.BlockSpec((rt, I), lambda r, c: (r, 0)),    # x (row tile)
                pl.BlockSpec((I, Pp), lambda r, c: (0, 0)),    # w1 (invariant)
                pl.BlockSpec((Pp, Kp), lambda r, c: (0, 0)),   # wh (invariant)
                pl.BlockSpec((Pp, ct), lambda r, c: (0, c)),   # wf (C tile)
                pl.BlockSpec((Kp, ct), lambda r, c: (0, c)),   # ph (C tile)
                pl.BlockSpec((1, ct), lambda r, c: (0, c)),    # folded bias
                pl.BlockSpec((I, ct), lambda r, c: (0, c)),    # w3 (C tile)
                pl.BlockSpec((1, ct), lambda r, c: (0, c)),    # b3
            ],
            out_specs=pl.BlockSpec((b_tile, ct), lambda r, c: (r, c)),
            scratch_shapes=[pltpu.VMEM((rt, Pp), wd),          # h
                            pltpu.VMEM((rt, Kp), wd)],         # hier
        ),
        compiler_params=pltpu.CompilerParams(
            dimension_semantics=("parallel", "arbitrary"),
            vmem_limit_bytes=vmem_limit),
        cost_estimate=pl.CostEstimate(flops=flops,
                                      transcendentals=transcendentals,
                                      bytes_accessed=bytes_accessed),
    )(x2, packed["w1_t"], packed["wh_t"], packed["wf_t"], packed["ph"],
      packed["bt"], packed["w3_t"], packed["b3"])

    return out_padded[:, :C]


# -----------------------------------------------------------------------------
# Pure-JAX reference (mirrors the PyTorch forward exactly)
# -----------------------------------------------------------------------------
def laat_reference(x, p):
    h = jnp.tanh(x @ p["w1"].T)                                   # [B,S,P]
    att = (h @ p["wf"].T + p["bf"]) @ p["pall"]
    att = att + (h @ p["wl1"].T + p["bl1"]) @ p["pl1"]
    att = att + (h @ p["ws"].T + p["bs"]) @ p["ps"]
    att = att + (h @ p["wc"].T + p["bc"]) @ p["pc"]
    att = jax.nn.softmax(att, axis=1)                             # over seq
    att = jnp.swapaxes(att, 1, 2)                                 # [B,C,S]
    wo = att @ x                                                  # [B,C,I]
    return jnp.sum(p["w3"][None, :, :] * wo, axis=2) + p["b3"][0]


# -----------------------------------------------------------------------------
# Deterministic synthetic parameters (normal(0, 0.03) like _init_weights)
# -----------------------------------------------------------------------------
def make_params(key, input_size, proj_size, num_classes,
                n_chapter, n_section, n_level1):
    keys = jax.random.split(key, 12)
    std = 0.03
    nrm = lambda k, shp: (std * jax.random.normal(k, shp)).astype(jnp.float32)

    # Synthetic ICD-9 hierarchy: class c belongs to group (c mod n_groups).
    def group_perm(n_groups):
        cls = jnp.arange(num_classes)
        grp = jnp.arange(n_groups)[:, None]
        return (grp == (cls[None, :] % n_groups)).astype(jnp.float32)

    return {
        "w1":  nrm(keys[0], (proj_size, input_size)),
        "wf":  nrm(keys[1], (num_classes, proj_size)),
        "bf":  nrm(keys[2], (1, num_classes)),
        "pall": jnp.eye(num_classes, dtype=jnp.float32),
        "wl1": nrm(keys[3], (n_level1, proj_size)),
        "bl1": nrm(keys[4], (1, n_level1)),
        "pl1": group_perm(n_level1),
        "ws":  nrm(keys[5], (n_section, proj_size)),
        "bs":  nrm(keys[6], (1, n_section)),
        "ps":  group_perm(n_section),
        "wc":  nrm(keys[7], (n_chapter, proj_size)),
        "bc":  nrm(keys[8], (1, n_chapter)),
        "pc":  group_perm(n_chapter),
        "w3":  nrm(keys[9], (num_classes, input_size)),
        "b3":  nrm(keys[10], (1, num_classes)),
    }


if __name__ == "__main__":
    key = jax.random.PRNGKey(0)
    k_x, k_p, k_x2, k_p2 = jax.random.split(key, 4)

    # ---- test 1: small shapes; exact f32 path + default bf16 fast path -----
    B, S, I = 2, 16, 64            # batch, seq_len, input_size
    P, C = 32, 32                  # projection_size, num_classes
    N_CH, N_SEC, N_L1 = 8, 16, 24  # synthetic hierarchy sizes
    x = jax.random.normal(k_x, (B, S, I), dtype=jnp.float32)
    params = make_params(k_p, I, P, C, N_CH, N_SEC, N_L1)
    ref = laat_reference(x, params)

    packed_f32 = pack_laat_params(params, c_tile=256, matmul_dtype=jnp.float32)
    out = jax.block_until_ready(laat_forward(x, packed_f32))
    assert out.shape == (B, C), out.shape
    assert jnp.allclose(out, ref, atol=1e-4, rtol=1e-4), (
        float(jnp.max(jnp.abs(out - ref))))

    packed_bf16 = pack_laat_params(params, c_tile=256, matmul_dtype=jnp.bfloat16)
    out_fast = jax.block_until_ready(
        laat_forward(x, packed_bf16, approx_recip=True))
    assert out_fast.shape == (B, C), out_fast.shape
    assert jnp.allclose(out_fast, ref, atol=2e-2, rtol=2e-2), (
        float(jnp.max(jnp.abs(out_fast - ref))))

    # ---- test 2: multiple row tiles + multiple C tiles + padded/masked S ---
    B2, S2, I2 = 16, 12, 64
    P2, C2 = 40, 200
    x2 = jax.random.normal(k_x2, (B2, S2, I2), dtype=jnp.float32)
    params2 = make_params(k_p2, I2, P2, C2, N_CH, N_SEC, N_L1)
    ref2 = laat_reference(x2, params2)
    packed2 = pack_laat_params(params2, c_tile=128, matmul_dtype=jnp.float32)
    out2 = jax.block_until_ready(laat_forward(x2, packed2, b_tile=8))
    assert out2.shape == (B2, C2), out2.shape
    assert jnp.allclose(out2, ref2, atol=1e-4, rtol=1e-4), (
        float(jnp.max(jnp.abs(out2 - ref2))))

    print("KERNEL_OK")
</pallas_src>

<mosaic_0001>
module attributes {stable_mosaic.version = 11 : i64} {
  func.func @_laat_kernel(%arg0: i32, %arg1: i32, %arg2: memref<32x64xf32, #tpu.memory_space<vmem>>, %arg3: memref<64x128xf32, #tpu.memory_space<vmem>>, %arg4: memref<128x128xf32, #tpu.memory_space<vmem>>, %arg5: memref<128x256xf32, #tpu.memory_space<vmem>>, %arg6: memref<128x256xf32, #tpu.memory_space<vmem>>, %arg7: memref<1x256xf32, #tpu.memory_space<vmem>>, %arg8: memref<64x256xf32, #tpu.memory_space<vmem>>, %arg9: memref<1x256xf32, #tpu.memory_space<vmem>>, %arg10: memref<2x256xf32, #tpu.memory_space<vmem>>, %arg11: memref<32x128xf32, #tpu.memory_space<vmem>>, %arg12: memref<32x128xf32, #tpu.memory_space<vmem>>) attributes {dimension_semantics = [#tpu.dimension_semantics<parallel>, #tpu.dimension_semantics<arbitrary>], iteration_bounds = array<i64: 1, 1>, scalar_prefetch = 0 : i64, scratch_operands = 2 : i64, tpu.core_type = #tpu.core_type<tc>, window_params = [{transform_indices = @transform_0, window_bounds = array<i64: 32, 64>}, {pipeline_mode = #tpu.pipeline_mode<synchronous>, transform_indices = @transform_1, window_bounds = array<i64: 64, 128>}, {pipeline_mode = #tpu.pipeline_mode<synchronous>, transform_indices = @transform_2, window_bounds = array<i64: 128, 128>}, {transform_indices = @transform_3, window_bounds = array<i64: 128, 256>}, {transform_indices = @transform_4, window_bounds = array<i64: 128, 256>}, {transform_indices = @transform_5, window_bounds = array<i64: 1, 256>}, {transform_indices = @transform_6, window_bounds = array<i64: 64, 256>}, {transform_indices = @transform_7, window_bounds = array<i64: 1, 256>}, {transform_indices = @transform_8, window_bounds = array<i64: 2, 256>}]} {
    %c0_i32 = arith.constant 0 : i32
    %0 = arith.cmpi eq, %arg1, %c0_i32 : i32
    %1 = arith.extui %0 : i1 to i32
    %c0_i32_0 = arith.constant 0 : i32
    %2 = arith.cmpi ne, %1, %c0_i32_0 : i32
    scf.if %2 {
      %c0_23 = arith.constant 0 : index
      %c0_24 = arith.constant 0 : index
      %34 = vector.load %arg2[%c0_23, %c0_24] : memref<32x64xf32, #tpu.memory_space<vmem>>, vector<32x64xf32>
      %c0_25 = arith.constant 0 : index
      %c0_26 = arith.constant 0 : index
      %35 = vector.load %arg3[%c0_25, %c0_26] : memref<64x128xf32, #tpu.memory_space<vmem>>, vector<64x128xf32>
      %cst_27 = arith.constant dense<0.000000e+00> : vector<32x128xf32>
      %36 = tpu.matmul %34, %35, %cst_27 {dimension_numbers = #tpu.dot_dimension_numbers<[1], [0], [0], [1], [0, 0, 1, 1], [], []>} : vector<32x64xf32>, vector<64x128xf32>, vector<32x128xf32> -> vector<32x128xf32>
      %37 = math.tanh %36 : vector<32x128xf32>
      %c0_28 = arith.constant 0 : index
      %c0_29 = arith.constant 0 : index
      %38 = vector.load %arg11[%c0_28, %c0_29] : memref<32x128xf32, #tpu.memory_space<vmem>>, vector<32x128xf32>
      tpu.vector_store %arg11[%c0_28, %c0_29], %37 {strides = array<i32>} : memref<32x128xf32, #tpu.memory_space<vmem>>, vector<32x128xf32>,
      %c0_30 = arith.constant 0 : index
      %c0_31 = arith.constant 0 : index
      %39 = vector.load %arg4[%c0_30, %c0_31] : memref<128x128xf32, #tpu.memory_space<vmem>>, vector<128x128xf32>
      %cst_32 = arith.constant dense<0.000000e+00> : vector<32x128xf32>
      %40 = tpu.matmul %37, %39, %cst_32 {dimension_numbers = #tpu.dot_dimension_numbers<[1], [0], [0], [1], [0, 0, 1, 1], [], []>} : vector<32x128xf32>, vector<128x128xf32>, vector<32x128xf32> -> vector<32x128xf32>
      %c0_33 = arith.constant 0 : index
      %c0_34 = arith.constant 0 : index
      %41 = vector.load %arg12[%c0_33, %c0_34] : memref<32x128xf32, #tpu.memory_space<vmem>>, vector<32x128xf32>
      tpu.vector_store %arg12[%c0_33, %c0_34], %40 {strides = array<i32>} : memref<32x128xf32, #tpu.memory_space<vmem>>, vector<32x128xf32>,
    } else {
    }
    %c0 = arith.constant 0 : index
    %c0_1 = arith.constant 0 : index
    %3 = vector.load %arg11[%c0, %c0_1] : memref<32x128xf32, #tpu.memory_space<vmem>>, vector<32x128xf32>
    %c0_2 = arith.constant 0 : index
    %c0_3 = arith.constant 0 : index
    %4 = vector.load %arg5[%c0_2, %c0_3] : memref<128x256xf32, #tpu.memory_space<vmem>>, vector<128x256xf32>
    %cst = arith.constant dense<0.000000e+00> : vector<32x256xf32>
    %5 = tpu.matmul %3, %4, %cst {dimension_numbers = #tpu.dot_dimension_numbers<[1], [0], [0], [1], [0, 0, 1, 1], [], []>} : vector<32x128xf32>, vector<128x256xf32>, vector<32x256xf32> -> vector<32x256xf32>
    %c0_4 = arith.constant 0 : index
    %c0_5 = arith.constant 0 : index
    %6 = vector.load %arg12[%c0_4, %c0_5] : memref<32x128xf32, #tpu.memory_space<vmem>>, vector<32x128xf32>
    %c0_6 = arith.constant 0 : index
    %c0_7 = arith.constant 0 : index
    %7 = vector.load %arg6[%c0_6, %c0_7] : memref<128x256xf32, #tpu.memory_space<vmem>>, vector<128x256xf32>
    %cst_8 = arith.constant dense<0.000000e+00> : vector<32x256xf32>
    %8 = tpu.matmul %6, %7, %cst_8 {dimension_numbers = #tpu.dot_dimension_numbers<[1], [0], [0], [1], [0, 0, 1, 1], [], []>} : vector<32x128xf32>, vector<128x256xf32>, vector<32x256xf32> -> vector<32x256xf32>
    %9 = arith.addf %5, %8 : vector<32x256xf32>
    %c0_9 = arith.constant 0 : index
    %c0_10 = arith.constant 0 : index
    %10 = vector.load %arg7[%c0_9, %c0_10] : memref<1x256xf32, #tpu.memory_space<vmem>>, vector<1x256xf32>
    %11 = vector.broadcast %10 : vector<1x256xf32> to vector<32x256xf32>
    %12 = arith.addf %9, %11 : vector<32x256xf32>
    %13 = vector.shape_cast %12 : vector<32x256xf32> to vector<2x16x256xf32>
    %cst_11 = arith.constant dense<0xFF800000> : vector<2x256xf32>
    %14 = vector.multi_reduction <maximumf>, %13, %cst_11 [1] : vector<2x16x256xf32> to vector<2x256xf32>
    %15 = vector.shape_cast %14 : vector<2x256xf32> to vector<2x1x256xf32>
    %16 = vector.broadcast %15 : vector<2x1x256xf32> to vector<2x16x256xf32>
    %17 = arith.subf %13, %16 : vector<2x16x256xf32>
    %18 = math.exp %17 : vector<2x16x256xf32>
    %cst_12 = arith.constant dense<0.000000e+00> : vector<2x256xf32>
    %19 = vector.multi_reduction <add>, %18, %cst_12 [1] : vector<2x16x256xf32> to vector<2x256xf32>
    %20 = vector.shape_cast %19 : vector<2x256xf32> to vector<2x1x256xf32>
    %21 = tpu.reciprocal %20 : vector<2x1x256xf32> -> vector<2x1x256xf32>
    %22 = vector.broadcast %21 : vector<2x1x256xf32> to vector<2x16x256xf32>
    %23 = arith.mulf %18, %22 : vector<2x16x256xf32>
    %c0_13 = arith.constant 0 : index
    %c0_14 = arith.constant 0 : index
    %24 = vector.load %arg2[%c0_13, %c0_14] : memref<32x64xf32, #tpu.memory_space<vmem>>, vector<32x64xf32>
    %c0_15 = arith.constant 0 : index
    %c0_16 = arith.constant 0 : index
    %25 = vector.load %arg8[%c0_15, %c0_16] : memref<64x256xf32, #tpu.memory_space<vmem>>, vector<64x256xf32>
    %cst_17 = arith.constant dense<0.000000e+00> : vector<32x256xf32>
    %26 = tpu.matmul %24, %25, %cst_17 {dimension_numbers = #tpu.dot_dimension_numbers<[1], [0], [0], [1], [0, 0, 1, 1], [], []>} : vector<32x64xf32>, vector<64x256xf32>, vector<32x256xf32> -> vector<32x256xf32>
    %27 = vector.shape_cast %26 : vector<32x256xf32> to vector<2x16x256xf32>
    %28 = arith.mulf %23, %27 : vector<2x16x256xf32>
    %cst_18 = arith.constant dense<0.000000e+00> : vector<2x256xf32>
    %29 = vector.multi_reduction <add>, %28, %cst_18 [1] : vector<2x16x256xf32> to vector<2x256xf32>
    %c0_19 = arith.constant 0 : index
    %c0_20 = arith.constant 0 : index
    %30 = vector.load %arg9[%c0_19, %c0_20] : memref<1x256xf32, #tpu.memory_space<vmem>>, vector<1x256xf32>
    %31 = vector.broadcast %30 : vector<1x256xf32> to vector<2x256xf32>
    %32 = arith.addf %29, %31 : vector<2x256xf32>
    %c0_21 = arith.constant 0 : index
    %c0_22 = arith.constant 0 : index
    %33 = vector.load %arg10[%c0_21, %c0_22] : memref<2x256xf32, #tpu.memory_space<vmem>>, vector<2x256xf32>
    tpu.vector_store %arg10[%c0_21, %c0_22], %32 {strides = array<i32>} : memref<2x256xf32, #tpu.memory_space<vmem>>, vector<2x256xf32>,
    return
  }
  func.func @transform_0(%arg0: i32, %arg1: i32) -> (i32, i32) {
    %c0_i32 = arith.constant 0 : i32
    %c0_i32_0 = arith.constant 0 : i32
    return %arg0, %c0_i32 : i32, i32
  }
  func.func @transform_1(%arg0: i32, %arg1: i32) -> (i32, i32) {
    %c0_i32 = arith.constant 0 : i32
    %c0_i32_0 = arith.constant 0 : i32
    %c0_i32_1 = arith.constant 0 : i32
    return %c0_i32, %c0_i32_0 : i32, i32
  }
  func.func @transform_2(%arg0: i32, %arg1: i32) -> (i32, i32) {
    %c0_i32 = arith.constant 0 : i32
    %c0_i32_0 = arith.constant 0 : i32
    %c0_i32_1 = arith.constant 0 : i32
    return %c0_i32, %c0_i32_0 : i32, i32
  }
  func.func @transform_3(%arg0: i32, %arg1: i32) -> (i32, i32) {
    %c0_i32 = arith.constant 0 : i32
    %c0_i32_0 = arith.constant 0 : i32
    return %c0_i32, %arg1 : i32, i32
  }
  func.func @transform_4(%arg0: i32, %arg1: i32) -> (i32, i32) {
    %c0_i32 = arith.constant 0 : i32
    %c0_i32_0 = arith.constant 0 : i32
    return %c0_i32, %arg1 : i32, i32
  }
  func.func @transform_5(%arg0: i32, %arg1: i32) -> (i32, i32) {
    %c0_i32 = arith.constant 0 : i32
    %c0_i32_0 = arith.constant 0 : i32
    return %c0_i32, %arg1 : i32, i32
  }
  func.func @transform_6(%arg0: i32, %arg1: i32) -> (i32, i32) {
    %c0_i32 = arith.constant 0 : i32
    %c0_i32_0 = arith.constant 0 : i32
    return %c0_i32, %arg1 : i32, i32
  }
  func.func @transform_7(%arg0: i32, %arg1: i32) -> (i32, i32) {
    %c0_i32 = arith.constant 0 : i32
    %c0_i32_0 = arith.constant 0 : i32
    return %c0_i32, %arg1 : i32, i32
  }
  func.func @transform_8(%arg0: i32, %arg1: i32) -> (i32, i32) {
    %c0_i32 = arith.constant 0 : i32
    return %arg0, %arg1 : i32, i32
  }
}

</mosaic_0001>

<llo_original>
// kernel: tpu_custom_call.1
$region0: #{tpu_custom_call.1}
  #allocation0 [shape = 'u32[]', space=smem, size = 0x4, offset = 0x4, fixed_abs, tag = 'smem constant byte address 0x4 - core index']
  #allocation1 [shape = 'u32[144,128]{1,0:T(1,128)}', space=vmem, size = 0x12000, scoped, tag = 'internal scratch']
  #allocation2 [shape = 'f32[32,128]{1,0:T(8,128)}', space=vmem, size = 0x4000, scoped, tag = 'scratch operand']
  #allocation3 [shape = 'f32[32,128]{1,0:T(8,128)}', space=vmem, size = 0x4000, scoped, tag = 'scratch operand']
  %s0 = inlined_call_operand.hbm [shape: f32[32,64], index: 0, kind: input, shape index: {}]
  %s1 = inlined_call_operand.hbm [shape: f32[64,128], index: 1, kind: input, shape index: {}]
  %s2 = inlined_call_operand.hbm [shape: f32[128,128], index: 2, kind: input, shape index: {}]
  %s3 = inlined_call_operand.hbm [shape: f32[128,256], index: 3, kind: input, shape index: {}]
  %s4 = inlined_call_operand.hbm [shape: f32[128,256], index: 4, kind: input, shape index: {}]
  %s5 = inlined_call_operand.vmem [shape: f32[1,256], index: 5, kind: input, shape index: {}]
  %s6 = inlined_call_operand.hbm [shape: f32[64,256], index: 6, kind: input, shape index: {}]
  %s7 = inlined_call_operand.vmem [shape: f32[1,256], index: 7, kind: input, shape index: {}]
  %s8 = inlined_call_operand.hbm [shape: f32[2,256], index: 8, kind: output, shape index: {}]
  %s9 = sld [smem:[#allocation0]]
  $region70: #{tpu_custom_call.1} parent=0
    _
  %s11 = ssub.s32 1, %s9
  %s12 = scalar_select 0, %s11, %s9
  $region1: #{tpu_custom_call.1} parent=0
    #allocation4 [shape = 'u8[16384]{0}', space=vmem, size = 0x4000, scoped, tag = 'input window, operand 0, single buffered']
    #allocation5 [shape = 's32[1]{0}', space=sflag, size = 0x4, scoped, tag = 'scoped memory for tpu_custom_call.1']
    #allocation6 [shape = 's32[1]{0}', space=sflag, size = 0x4, scoped, tag = 'scoped memory for tpu_custom_call.1']
    #allocation7 [shape = 'u8[32768]{0}', space=vmem, size = 0x8000, scoped, tag = 'input window, operand 1, single buffered']
    #allocation8 [shape = 's32[1]{0}', space=sflag, size = 0x4, scoped, tag = 'scoped memory for tpu_custom_call.1']
    #allocation9 [shape = 'u8[65536]{0}', space=vmem, size = 0x10000, scoped, tag = 'input window, operand 2, single buffered']
    #allocation10 [shape = 'u8[131072]{0}', space=vmem, size = 0x20000, scoped, tag = 'input window, operand 3, single buffered']
    #allocation11 [shape = 's32[1]{0}', space=sflag, size = 0x4, scoped, tag = 'scoped memory for tpu_custom_call.1']
    #allocation12 [shape = 'u8[131072]{0}', space=vmem, size = 0x20000, scoped, tag = 'input window, operand 4, single buffered']
    #allocation13 [shape = 'u8[65536]{0}', space=vmem, size = 0x10000, scoped, tag = 'input window, operand 6, single buffered']
    #allocation14 [shape = 's32[1]{0}', space=sflag, size = 0x4, scoped, tag = 'scoped memory for tpu_custom_call.1']
    #allocation15 [shape = 'u8[2048]{0}', space=vmem, size = 0x800, scoped, tag = 'output window, operand 0, single buffered']
    %13 = vsyncpa [#allocation5], 0
    %14 = vsyncpa [#allocation8], 0
    %15 = vsyncpa [#allocation11], 0
    %16 = vsyncpa [#allocation14], 0
    %17 = vsyncpa [#allocation6], 0
    // Predicated region
    $region2: #{tpu_custom_call.1} parent=1 // pred_check
      _
    $region3: #{tpu_custom_call.1} parent=1 // pred_check_branch
      %19 = sbr.rel (0) target = $region5
    $region4: #{tpu_custom_call.1} parent=1 // pred_region
      %s21 = ssub.s32 512, 512
      %22 = vsyncadd [#allocation5], %s21
      %s23 = sshll.u32 [#allocation4], 4
      %s24 = int_to_ptr.vmem [resolvable:$true] %s23
      %29 = dma.hbm_to_vmem [thread:$0]  %s0, 512, %s24, [#allocation5], 128, 128, 8
    $region5: #{tpu_custom_call.1} parent=1 // pred_fallthru
      _
    // Predicated region
    $region6: #{tpu_custom_call.1} parent=1 // pred_check
      _
    $region7: #{tpu_custom_call.1} parent=1 // pred_check_branch
      %31 = sbr.rel (0) target = $region9
    $region8: #{tpu_custom_call.1} parent=1 // pred_region
      %s33 = ssub.s32 1024, 1024
      %34 = vsyncadd [#allocation8], %s33
      %s35 = sshll.u32 [#allocation7], 4
      %s36 = int_to_ptr.vmem [resolvable:$true] %s35
      %41 = dma.hbm_to_vmem [thread:$0]  %s1, 1024, %s36, [#allocation8], 128, 128, 8
    $region9: #{tpu_custom_call.1} parent=1 // pred_fallthru
      _
    // Predicated region
    $region10: #{tpu_custom_call.1} parent=1 // pred_check
      _
    $region11: #{tpu_custom_call.1} parent=1 // pred_check_branch
      %43 = sbr.rel (0) target = $region13
    $region12: #{tpu_custom_call.1} parent=1 // pred_region
      %s45 = ssub.s32 2048, 2048
      %46 = vsyncadd [#allocation8], %s45
      %s47 = sshll.u32 [#allocation9], 4
      %s48 = int_to_ptr.vmem [resolvable:$true] %s47
      %53 = dma.hbm_to_vmem [thread:$0]  %s2, 2048, %s48, [#allocation8], 128, 128, 8
    $region13: #{tpu_custom_call.1} parent=1 // pred_fallthru
      _
    // Predicated region
    $region14: #{tpu_custom_call.1} parent=1 // pred_check
      _
    $region15: #{tpu_custom_call.1} parent=1 // pred_check_branch
      %55 = sbr.rel (0) target = $region17
    $region16: #{tpu_custom_call.1} parent=1 // pred_region
      %s57 = ssub.s32 4096, 4096
      %58 = vsyncadd [#allocation11], %s57
      %s59 = sshll.u32 [#allocation10], 4
      %s60 = int_to_ptr.vmem [resolvable:$true] %s59
      %65 = dma.hbm_to_vmem [thread:$0]  %s3, 4096, %s60, [#allocation11], 256, 256, 16
    $region17: #{tpu_custom_call.1} parent=1 // pred_fallthru
      _
    // Predicated region
    $region18: #{tpu_custom_call.1} parent=1 // pred_check
      _
    $region19: #{tpu_custom_call.1} parent=1 // pred_check_branch
      %67 = sbr.rel (0) target = $region21
    $region20: #{tpu_custom_call.1} parent=1 // pred_region
      %s69 = ssub.s32 4096, 4096
      %70 = vsyncadd [#allocation11], %s69
      %s71 = sshll.u32 [#allocation12], 4
      %s72 = int_to_ptr.vmem [resolvable:$true] %s71
      %77 = dma.hbm_to_vmem [thread:$0]  %s4, 4096, %s72, [#allocation11], 256, 256, 16
    $region21: #{tpu_custom_call.1} parent=1 // pred_fallthru
      _
    // Predicated region
    $region22: #{tpu_custom_call.1} parent=1 // pred_check
      _
    $region23: #{tpu_custom_call.1} parent=1 // pred_check_branch
      %79 = sbr.rel (0) target = $region25
    $region24: #{tpu_custom_call.1} parent=1 // pred_region
      _
    $region25: #{tpu_custom_call.1} parent=1 // pred_fallthru
      _
    // Predicated region
    $region26: #{tpu_custom_call.1} parent=1 // pred_check
      _
    $region27: #{tpu_custom_call.1} parent=1 // pred_check_branch
      %81 = sbr.rel (0) target = $region29
    $region28: #{tpu_custom_call.1} parent=1 // pred_region
      %s83 = ssub.s32 2048, 2048
      %84 = vsyncadd [#allocation14], %s83
      %s85 = sshll.u32 [#allocation13], 4
      %s86 = int_to_ptr.vmem [resolvable:$true] %s85
      %91 = dma.hbm_to_vmem [thread:$0]  %s6, 2048, %s86, [#allocation14], 256, 256, 16
    $region29: #{tpu_custom_call.1} parent=1 // pred_fallthru
      _
    // Predicated region
    $region30: #{tpu_custom_call.1} parent=1 // pred_check
      _
    $region31: #{tpu_custom_call.1} parent=1 // pred_check_branch
      %93 = sbr.rel (0) target = $region33
    $region32: #{tpu_custom_call.1} parent=1 // pred_region
      _
    $region33: #{tpu_custom_call.1} parent=1 // pred_fallthru
      _
    // Predicated region
    $region34: #{tpu_custom_call.1} parent=1 // pred_check
      _
    $region35: #{tpu_custom_call.1} parent=1 // pred_check_branch
      %95 = sbr.rel (0) target = $region37
    $region36: #{tpu_custom_call.1} parent=1 // pred_region
      %96 = dma.done [#allocation5], 512
    $region37: #{tpu_custom_call.1} parent=1 // pred_fallthru
      _
    // Predicated region
    $region38: #{tpu_custom_call.1} parent=1 // pred_check
      _
    $region39: #{tpu_custom_call.1} parent=1 // pred_check_branch
      %98 = sbr.rel (0) target = $region41
    $region40: #{tpu_custom_call.1} parent=1 // pred_region
      %99 = dma.done [#allocation8], 1024
    $region41: #{tpu_custom_call.1} parent=1 // pred_fallthru
      _
    // Predicated region
    $region42: #{tpu_custom_call.1} parent=1 // pred_check
      _
    $region43: #{tpu_custom_call.1} parent=1 // pred_check_branch
      %101 = sbr.rel (0) target = $region45
    $region44: #{tpu_custom_call.1} parent=1 // pred_region
      %102 = dma.done [#allocation8], 2048
    $region45: #{tpu_custom_call.1} parent=1 // pred_fallthru
      _
    // Predicated region
    $region46: #{tpu_custom_call.1} parent=1 // pred_check
      _
    $region47: #{tpu_custom_call.1} parent=1 // pred_check_branch
      %104 = sbr.rel (0) target = $region49
    $region48: #{tpu_custom_call.1} parent=1 // pred_region
      %105 = dma.done [#allocation11], 4096
    $region49: #{tpu_custom_call.1} parent=1 // pred_fallthru
      _
    // Predicated region
    $region50: #{tpu_custom_call.1} parent=1 // pred_check
      _
    $region51: #{tpu_custom_call.1} parent=1 // pred_check_branch
      %107 = sbr.rel (0) target = $region53
    $region52: #{tpu_custom_call.1} parent=1 // pred_region
      %108 = dma.done [#allocation11], 4096
    $region53: #{tpu_custom_call.1} parent=1 // pred_fallthru
      _
    // Predicated region
    $region54: #{tpu_custom_call.1} parent=1 // pred_check
      _
    $region55: #{tpu_custom_call.1} parent=1 // pred_check_branch
      %110 = sbr.rel (0) target = $region57
    $region56: #{tpu_custom_call.1} parent=1 // pred_region
      %111 = dma.done [#allocation14], 2048
    $region57: #{tpu_custom_call.1} parent=1 // pred_fallthru
      _
    %p112 = scmp.eq.s32.totalorder 0, 0
    // Predicated region
    $region58: #{tpu_custom_call.1} parent=1 // pred_check
      %p113 = pneg %p112
    $region59: #{tpu_custom_call.1} parent=1 // pred_check_branch
      %115 = sbr.rel (%p113) target = $region61
    $region60: #{tpu_custom_call.1} parent=1 // pred_region
      %v116 = vld [vmem:[#allocation4] sm:$0xff]
      %v117 = vld [vmem:[#allocation4 + $0x8] sm:$0xff]
      %v118 = vld [vmem:[#allocation4 + $0x10] sm:$0xff]
      %v119 = vld [vmem:[#allocation4 + $0x18] sm:$0xff]
      %v120 = vld [vmem:[#allocation7] sm:$0xff]
      %v121 = vld [vmem:[#allocation7 + $0x8] sm:$0xff]
      %v122 = vld [vmem:[#allocation7 + $0x10] sm:$0xff]
      %v123 = vld [vmem:[#allocation7 + $0x18] sm:$0xff]
      %v124 = vld [vmem:[#allocation7 + $0x20] sm:$0xff]
      %v125 = vld [vmem:[#allocation7 + $0x28] sm:$0xff]
      %v126 = vld [vmem:[#allocation7 + $0x30] sm:$0xff]
      %v127 = vld [vmem:[#allocation7 + $0x38] sm:$0xff]
      %vm128 = vcmask 523264
      %v130 = vsel %vm128, %v116, 0
      %v133 = vsel %vm128, %v117, 0
      %v136 = vsel %vm128, %v118, 0
      %v139 = vsel %vm128, %v119, 0
      %141 = vmatprep.subr.mxu0 0.0
      %142 = vmatpush1.msra.mxu0 %v120
      %143 = vmatprep.subr.mxu0 0.0
      %144 = vmatpush1.msra.mxu0 %v121
      %145 = vmatprep.subr.mxu0 0.0
      %146 = vmatpush1.msra.mxu0 %v122
      %147 = vmatprep.subr.mxu0 0.0
      %148 = vmatpush1.msra.mxu0 %v123
      %149 = vmatprep.subr.mxu0 0.0
      %150 = vmatpush1.msra.mxu0 %v124
      %151 = vmatprep.subr.mxu0 0.0
      %152 = vmatpush1.msra.mxu0 %v125
      %153 = vmatprep.subr.mxu0 0.0
      %154 = vmatpush1.msra.mxu0 %v126
      %155 = vmatprep.subr.mxu0 0.0
      %156 = vmatpush1.msra.mxu0 %v127
      %157 = vmatprep.subr.mxu0 0.0
      %158 = vmatpush1.msra.mxu0 0.0
      %159 = vmatprep.subr.mxu0 0.0
      %160 = vmatpush1.msra.mxu0 0.0
      %161 = vmatprep.subr.mxu0 0.0
      %162 = vmatpush1.msra.mxu0 0.0
      %163 = vmatprep.subr.mxu0 0.0
      %164 = vmatpush1.msra.mxu0 0.0
      %165 = vmatprep.subr.mxu0 0.0
      %166 = vmatpush1.msra.mxu0 0.0
      %167 = vmatprep.subr.mxu0 0.0
      %168 = vmatpush1.msra.mxu0 0.0
      %169 = vmatprep.subr.mxu0 0.0
      %170 = vmatpush1.msra.mxu0 0.0
      %171 = vmatprep.subr.mxu0 0.0
      %172 = vmatpush1.msra.mxu0 0.0
      %173 = vmatprep.subr.mxu0 0.0
      %174 = vmatpush1.msra.mxu0 0.0
      %175 = vmatprep.subr.mxu0 0.0
      %176 = vmatpush1.msra.mxu0 0.0
      %177 = vmatprep.subr.mxu0 0.0
      %178 = vmatpush1.msra.mxu0 0.0
      %179 = vmatprep.subr.mxu0 0.0
      %180 = vmatpush1.msra.mxu0 0.0
      %181 = vmatprep.subr.mxu0 0.0
      %182 = vmatpush1.msra.mxu0 0.0
      %183 = vmatprep.subr.mxu0 0.0
      %184 = vmatpush1.msra.mxu0 0.0
      %185 = vmatprep.subr.mxu0 0.0
      %186 = vmatpush1.msra.mxu0 0.0
      %187 = vmatprep.subr.mxu0 0.0
      %188 = vmatpush1.msra.mxu0 0.0
      %189 = vmatprep.subr.mxu0 0.0
      %190 = vmatpush1.msra.mxu0 0.0
      %191 = vmatprep.subr.mxu0 0.0
      %192 = vmatpush1.msra.mxu0 0.0
      %193 = vmatprep.subr.mxu0 0.0
      %194 = vmatpush1.msra.mxu0 0.0
      %195 = vmatprep.subr.mxu0 0.0
      %196 = vmatpush1.msra.mxu0 0.0
      %197 = vmatprep.subr.mxu0 0.0
      %198 = vmatpush1.msra.mxu0 0.0
      %199 = vmatprep.subr.mxu0 0.0
      %200 = vmatpush1.msra.mxu0 0.0
      %201 = vmatprep.subr.mxu0 0.0
      %202 = vmatpush1.msra.mxu0 0.0
      %203 = vmatprep.subr.mxu0 0.0
      %204 = vmatpush1.msra.mxu0 0.0
      %205 = vmatprep.mubr.f32.mxu0 0.0
      %206 = vmatmul.mubr.f32.gmra.mrb[0].mxu0 %v130
      %v207 = vpop.f32.mrb[0].mxu0
      %v208 = vadd.f32 0.0, %v207
      %v209 = vpop.f32.mrb[0].mxu0
      %210 = vmatprep.mubr.f32.mxu0 0.0
      %211 = vmatmul.mubr.f32.gmra.mrb[0].mxu0 %v133
      %v212 = vpop.f32.mrb[0].mxu0
      %v213 = vadd.f32 0.0, %v212
      %v214 = vpop.f32.mrb[0].mxu0
      %215 = vmatprep.mubr.f32.mxu0 0.0
      %216 = vmatmul.mubr.f32.gmra.mrb[0].mxu0 %v136
      %v217 = vpop.f32.mrb[0].mxu0
      %v218 = vadd.f32 0.0, %v217
      %v219 = vpop.f32.mrb[0].mxu0
      %220 = vmatprep.mubr.f32.mxu0 0.0
      %221 = vmatmul.mubr.f32.gmra.mrb[0].mxu0 %v139
      %v222 = vpop.f32.mrb[0].mxu0
      %v223 = vadd.f32 0.0, %v222
      %v224 = vpop.f32.mrb[0].mxu0
      %225 = vdwg.mxu0
      %v226 = vtanh.pop %v208
      %v227 = vtanh.pop %v213
      %v228 = vtanh.pop %v218
      %v229 = vtanh.pop %v223
      %230 = vst [vmem:[#allocation2] sm:$0xff] %v226
      %231 = vst [vmem:[#allocation2 + $0x8] sm:$0xff] %v227
      %232 = vst [vmem:[#allocation2 + $0x10] sm:$0xff] %v228
      %233 = vst [vmem:[#allocation2 + $0x18] sm:$0xff] %v229
      %v234 = vld [vmem:[#allocation9] sm:$0xff]
      %v235 = vld [vmem:[#allocation9 + $0x8] sm:$0xff]
      %v236 = vld [vmem:[#allocation9 + $0x10] sm:$0xff]
      %v237 = vld [vmem:[#allocation9 + $0x18] sm:$0xff]
      %v238 = vld [vmem:[#allocation9 + $0x20] sm:$0xff]
      %v239 = vld [vmem:[#allocation9 + $0x28] sm:$0xff]
      %v240 = vld [vmem:[#allocation9 + $0x30] sm:$0xff]
      %v241 = vld [vmem:[#allocation9 + $0x38] sm:$0xff]
      %v242 = vld [vmem:[#allocation9 + $0x40] sm:$0xff]
      %v243 = vld [vmem:[#allocation9 + $0x48] sm:$0xff]
      %v244 = vld [vmem:[#allocation9 + $0x50] sm:$0xff]
      %v245 = vld [vmem:[#allocation9 + $0x58] sm:$0xff]
      %v246 = vld [vmem:[#allocation9 + $0x60] sm:$0xff]
      %v247 = vld [vmem:[#allocation9 + $0x68] sm:$0xff]
      %v248 = vld [vmem:[#allocation9 + $0x70] sm:$0xff]
      %v249 = vld [vmem:[#allocation9 + $0x78] sm:$0xff]
      %250 = vmatprep.subr.mxu0 0.0
      %251 = vmatpush1.msra.mxu0 %v234
      %252 = vmatprep.subr.mxu0 0.0
      %253 = vmatpush1.msra.mxu0 %v235
      %254 = vmatprep.subr.mxu0 0.0
      %255 = vmatpush1.msra.mxu0 %v236
      %256 = vmatprep.subr.mxu0 0.0
      %257 = vmatpush1.msra.mxu0 %v237
      %258 = vmatprep.subr.mxu0 0.0
      %259 = vmatpush1.msra.mxu0 %v238
      %260 = vmatprep.subr.mxu0 0.0
      %261 = vmatpush1.msra.mxu0 %v239
      %262 = vmatprep.subr.mxu0 0.0
      %263 = vmatpush1.msra.mxu0 %v240
      %264 = vmatprep.subr.mxu0 0.0
      %265 = vmatpush1.msra.mxu0 %v241
      %266 = vmatprep.subr.mxu0 0.0
      %267 = vmatpush1.msra.mxu0 %v242
      %268 = vmatprep.subr.mxu0 0.0
      %269 = vmatpush1.msra.mxu0 %v243
      %270 = vmatprep.subr.mxu0 0.0
      %271 = vmatpush1.msra.mxu0 %v244
      %272 = vmatprep.subr.mxu0 0.0
      %273 = vmatpush1.msra.mxu0 %v245
      %274 = vmatprep.subr.mxu0 0.0
      %275 = vmatpush1.msra.mxu0 %v246
      %276 = vmatprep.subr.mxu0 0.0
      %277 = vmatpush1.msra.mxu0 %v247
      %278 = vmatprep.subr.mxu0 0.0
      %279 = vmatpush1.msra.mxu0 %v248
      %280 = vmatprep.subr.mxu0 0.0
      %281 = vmatpush1.msra.mxu0 %v249
      %282 = vmatprep.subr.mxu0 0.0
      %283 = vmatpush1.msra.mxu0 0.0
      %284 = vmatprep.subr.mxu0 0.0
      %285 = vmatpush1.msra.mxu0 0.0
      %286 = vmatprep.subr.mxu0 0.0
      %287 = vmatpush1.msra.mxu0 0.0
      %288 = vmatprep.subr.mxu0 0.0
      %289 = vmatpush1.msra.mxu0 0.0
      %290 = vmatprep.subr.mxu0 0.0
      %291 = vmatpush1.msra.mxu0 0.0
      %292 = vmatprep.subr.mxu0 0.0
      %293 = vmatpush1.msra.mxu0 0.0
      %294 = vmatprep.subr.mxu0 0.0
      %295 = vmatpush1.msra.mxu0 0.0
      %296 = vmatprep.subr.mxu0 0.0
      %297 = vmatpush1.msra.mxu0 0.0
      %298 = vmatprep.subr.mxu0 0.0
      %299 = vmatpush1.msra.mxu0 0.0
      %300 = vmatprep.subr.mxu0 0.0
      %301 = vmatpush1.msra.mxu0 0.0
      %302 = vmatprep.subr.mxu0 0.0
      %303 = vmatpush1.msra.mxu0 0.0
      %304 = vmatprep.subr.mxu0 0.0
      %305 = vmatpush1.msra.mxu0 0.0
      %306 = vmatprep.subr.mxu0 0.0
      %307 = vmatpush1.msra.mxu0 0.0
      %308 = vmatprep.subr.mxu0 0.0
      %309 = vmatpush1.msra.mxu0 0.0
      %310 = vmatprep.subr.mxu0 0.0
      %311 = vmatpush1.msra.mxu0 0.0
      %312 = vmatprep.subr.mxu0 0.0
      %313 = vmatpush1.msra.mxu0 0.0
      %314 = vmatprep.mubr.f32.mxu0 0.0
      %315 = vmatmul.mubr.f32.gmra.mrb[0].mxu0 %v226
      %v316 = vpop.f32.mrb[0].mxu0
      %v317 = vadd.f32 0.0, %v316
      %v318 = vpop.f32.mrb[0].mxu0
      %319 = vmatprep.mubr.f32.mxu0 0.0
      %320 = vmatmul.mubr.f32.gmra.mrb[0].mxu0 %v227
      %v321 = vpop.f32.mrb[0].mxu0
      %v322 = vadd.f32 0.0, %v321
      %v323 = vpop.f32.mrb[0].mxu0
      %324 = vmatprep.mubr.f32.mxu0 0.0
      %325 = vmatmul.mubr.f32.gmra.mrb[0].mxu0 %v228
      %v326 = vpop.f32.mrb[0].mxu0
      %v327 = vadd.f32 0.0, %v326
      %v328 = vpop.f32.mrb[0].mxu0
      %329 = vmatprep.mubr.f32.mxu0 0.0
      %330 = vmatmul.mubr.f32.gmra.mrb[0].mxu0 %v229
      %v331 = vpop.f32.mrb[0].mxu0
      %v332 = vadd.f32 0.0, %v331
      %v333 = vpop.f32.mrb[0].mxu0
      %334 = vdwg.mxu0
      %335 = vst [vmem:[#allocation3] sm:$0xff] %v317
      %336 = vst [vmem:[#allocation3 + $0x8] sm:$0xff] %v322
      %337 = vst [vmem:[#allocation3 + $0x10] sm:$0xff] %v327
      %338 = vst [vmem:[#allocation3 + $0x18] sm:$0xff] %v332
    $region61: #{tpu_custom_call.1} parent=1 // pred_fallthru
      _
    %v339 = vld [vmem:[#allocation2] sm:$0xff]
    %v340 = vld [vmem:[#allocation2 + $0x8] sm:$0xff]
    %v341 = vld [vmem:[#allocation2 + $0x10] sm:$0xff]
    %v342 = vld [vmem:[#allocation2 + $0x18] sm:$0xff]
    %v343 = vld [vmem:[#allocation10] sm:$0xff]
    %v344 = vld [vmem:[#allocation10 + $0x8] sm:$0xff]
    %v345 = vld [vmem:[#allocation10 + $0x10] sm:$0xff]
    %v346 = vld [vmem:[#allocation10 + $0x18] sm:$0xff]
    %v347 = vld [vmem:[#allocation10 + $0x20] sm:$0xff]
    %v348 = vld [vmem:[#allocation10 + $0x28] sm:$0xff]
    %v349 = vld [vmem:[#allocation10 + $0x30] sm:$0xff]
    %v350 = vld [vmem:[#allocation10 + $0x38] sm:$0xff]
    %v351 = vld [vmem:[#allocation10 + $0x40] sm:$0xff]
    %v352 = vld [vmem:[#allocation10 + $0x48] sm:$0xff]
    %v353 = vld [vmem:[#allocation10 + $0x50] sm:$0xff]
    %v354 = vld [vmem:[#allocation10 + $0x58] sm:$0xff]
    %v355 = vld [vmem:[#allocation10 + $0x60] sm:$0xff]
    %v356 = vld [vmem:[#allocation10 + $0x68] sm:$0xff]
    %v357 = vld [vmem:[#allocation10 + $0x70] sm:$0xff]
    %v358 = vld [vmem:[#allocation10 + $0x78] sm:$0xff]
    %v359 = vld [vmem:[#allocation10 + $0x80] sm:$0xff]
    %v360 = vld [vmem:[#allocation10 + $0x88] sm:$0xff]
    %v361 = vld [vmem:[#allocation10 + $0x90] sm:$0xff]
    %v362 = vld [vmem:[#allocation10 + $0x98] sm:$0xff]
    %v363 = vld [vmem:[#allocation10 + $0xa0] sm:$0xff]
    %v364 = vld [vmem:[#allocation10 + $0xa8] sm:$0xff]
    %v365 = vld [vmem:[#allocation10 + $0xb0] sm:$0xff]
    %v366 = vld [vmem:[#allocation10 + $0xb8] sm:$0xff]
    %v367 = vld [vmem:[#allocation10 + $0xc0] sm:$0xff]
    %v368 = vld [vmem:[#allocation10 + $0xc8] sm:$0xff]
    %v369 = vld [vmem:[#allocation10 + $0xd0] sm:$0xff]
    %v370 = vld [vmem:[#allocation10 + $0xd8] sm:$0xff]
    %v371 = vld [vmem:[#allocation10 + $0xe0] sm:$0xff]
    %v372 = vld [vmem:[#allocation10 + $0xe8] sm:$0xff]
    %v373 = vld [vmem:[#allocation10 + $0xf0] sm:$0xff]
    %v374 = vld [vmem:[#allocation10 + $0xf8] sm:$0xff]
    %v375 = vld [vmem:[#allocation3] sm:$0xff]
    %v376 = vld [vmem:[#allocation3 + $0x8] sm:$0xff]
    %v377 = vld [vmem:[#allocation3 + $0x10] sm:$0xff]
    %v378 = vld [vmem:[#allocation3 + $0x18] sm:$0xff]
    %v379 = vld [vmem:[#allocation12] sm:$0xff]
    %v380 = vld [vmem:[#allocation12 + $0x8] sm:$0xff]
    %v381 = vld [vmem:[#allocation12 + $0x10] sm:$0xff]
    %v382 = vld [vmem:[#allocation12 + $0x18] sm:$0xff]
    %v383 = vld [vmem:[#allocation12 + $0x20] sm:$0xff]
    %v384 = vld [vmem:[#allocation12 + $0x28] sm:$0xff]
    %v385 = vld [vmem:[#allocation12 + $0x30] sm:$0xff]
    %v386 = vld [vmem:[#allocation12 + $0x38] sm:$0xff]
    %v387 = vld [vmem:[#allocation12 + $0x40] sm:$0xff]
    %v388 = vld [vmem:[#allocation12 + $0x48] sm:$0xff]
    %v389 = vld [vmem:[#allocation12 + $0x50] sm:$0xff]
    %v390 = vld [vmem:[#allocation12 + $0x58] sm:$0xff]
    %v391 = vld [vmem:[#allocation12 + $0x60] sm:$0xff]
    %v392 = vld [vmem:[#allocation12 + $0x68] sm:$0xff]
    %v393 = vld [vmem:[#allocation12 + $0x70] sm:$0xff]
    %v394 = vld [vmem:[#allocation12 + $0x78] sm:$0xff]
    %v395 = vld [vmem:[#allocation12 + $0x80] sm:$0xff]
    %v396 = vld [vmem:[#allocation12 + $0x88] sm:$0xff]
    %v397 = vld [vmem:[#allocation12 + $0x90] sm:$0xff]
    %v398 = vld [vmem:[#allocation12 + $0x98] sm:$0xff]
    %v399 = vld [vmem:[#allocation12 + $0xa0] sm:$0xff]
    %v400 = vld [vmem:[#allocation12 + $0xa8] sm:$0xff]
    %v401 = vld [vmem:[#allocation12 + $0xb0] sm:$0xff]
    %v402 = vld [vmem:[#allocation12 + $0xb8] sm:$0xff]
    %v403 = vld [vmem:[#allocation12 + $0xc0] sm:$0xff]
    %v404 = vld [vmem:[#allocation12 + $0xc8] sm:$0xff]
    %v405 = vld [vmem:[#allocation12 + $0xd0] sm:$0xff]
    %v406 = vld [vmem:[#allocation12 + $0xd8] sm:$0xff]
    %v407 = vld [vmem:[#allocation12 + $0xe0] sm:$0xff]
    %v408 = vld [vmem:[#allocation12 + $0xe8] sm:$0xff]
    %v409 = vld [vmem:[#allocation12 + $0xf0] sm:$0xff]
    %v410 = vld [vmem:[#allocation12 + $0xf8] sm:$0xff]
    %411 = vmatprep.subr.mxu0 %v380
    %412 = vmatpush1.msra.mxu0 %v379
    %413 = vmatprep.subr.mxu0 %v382
    %414 = vmatpush1.msra.mxu0 %v381
    %415 = vmatprep.subr.mxu0 %v384
    %416 = vmatpush1.msra.mxu0 %v383
    %417 = vmatprep.subr.mxu0 %v386
    %418 = vmatpush1.msra.mxu0 %v385
    %419 = vmatprep.subr.mxu0 %v388
    %420 = vmatpush1.msra.mxu0 %v387
    %421 = vmatprep.subr.mxu0 %v390
    %422 = vmatpush1.msra.mxu0 %v389
    %423 = vmatprep.subr.mxu0 %v392
    %424 = vmatpush1.msra.mxu0 %v391
    %425 = vmatprep.subr.mxu0 %v394
    %426 = vmatpush1.msra.mxu0 %v393
    %427 = vmatprep.subr.mxu0 %v396
    %428 = vmatpush1.msra.mxu0 %v395
    %429 = vmatprep.subr.mxu0 %v398
    %430 = vmatpush1.msra.mxu0 %v397
    %431 = vmatprep.subr.mxu0 %v400
    %432 = vmatpush1.msra.mxu0 %v399
    %433 = vmatprep.subr.mxu0 %v402
    %434 = vmatpush1.msra.mxu0 %v401
    %435 = vmatprep.subr.mxu0 %v404
    %436 = vmatpush1.msra.mxu0 %v403
    %437 = vmatprep.subr.mxu0 %v406
    %438 = vmatpush1.msra.mxu0 %v405
    %439 = vmatprep.subr.mxu0 %v408
    %440 = vmatpush1.msra.mxu0 %v407
    %441 = vmatprep.subr.mxu0 %v410
    %442 = vmatpush1.msra.mxu0 %v409
    %443 = vmatprep.subr.mxu0 0.0
    %444 = vmatpush1.msra.mxu0 0.0
    %445 = vmatprep.subr.mxu0 0.0
    %446 = vmatpush1.msra.mxu0 0.0
    %447 = vmatprep.subr.mxu0 0.0
    %448 = vmatpush1.msra.mxu0 0.0
    %449 = vmatprep.subr.mxu0 0.0
    %450 = vmatpush1.msra.mxu0 0.0
    %451 = vmatprep.subr.mxu0 0.0
    %452 = vmatpush1.msra.mxu0 0.0
    %453 = vmatprep.subr.mxu0 0.0
    %454 = vmatpush1.msra.mxu0 0.0
    %455 = vmatprep.subr.mxu0 0.0
    %456 = vmatpush1.msra.mxu0 0.0
    %457 = vmatprep.subr.mxu0 0.0
    %458 = vmatpush1.msra.mxu0 0.0
    %459 = vmatprep.subr.mxu0 0.0
    %460 = vmatpush1.msra.mxu0 0.0
    %461 = vmatprep.subr.mxu0 0.0
    %462 = vmatpush1.msra.mxu0 0.0
    %463 = vmatprep.subr.mxu0 0.0
    %464 = vmatpush1.msra.mxu0 0.0
    %465 = vmatprep.subr.mxu0 0.0
    %466 = vmatpush1.msra.mxu0 0.0
    %467 = vmatprep.subr.mxu0 0.0
    %468 = vmatpush1.msra.mxu0 0.0
    %469 = vmatprep.subr.mxu0 0.0
    %470 = vmatpush1.msra.mxu0 0.0
    %471 = vmatprep.subr.mxu0 0.0
    %472 = vmatpush1.msra.mxu0 0.0
    %473 = vmatprep.subr.mxu0 0.0
    %474 = vmatpush1.msra.mxu0 0.0
    %475 = vmatprep.mubr.f32.mxu0 0.0
    %476 = vmatmul.mubr.f32.gmra.mrb[0].mxu0 %v375
    %v477 = vpop.f32.mrb[0].mxu0
    %v478 = vadd.f32 0.0, %v477
    %v479 = vpop.f32.mrb[0].mxu0
    %v480 = vadd.f32 0.0, %v479
    %481 = vmatprep.mubr.f32.mxu0 0.0
    %482 = vmatmul.mubr.f32.gmra.mrb[0].mxu0 %v376
    %v483 = vpop.f32.mrb[0].mxu0
    %v484 = vadd.f32 0.0, %v483
    %v485 = vpop.f32.mrb[0].mxu0
    %v486 = vadd.f32 0.0, %v485
    %487 = vmatprep.mubr.f32.mxu0 0.0
    %488 = vmatmul.mubr.f32.gmra.mrb[0].mxu0 %v377
    %v489 = vpop.f32.mrb[0].mxu0
    %v490 = vadd.f32 0.0, %v489
    %v491 = vpop.f32.mrb[0].mxu0
    %v492 = vadd.f32 0.0, %v491
    %493 = vmatprep.mubr.f32.mxu0 0.0
    %494 = vmatmul.mubr.f32.gmra.mrb[0].mxu0 %v378
    %v495 = vpop.f32.mrb[0].mxu0
    %v496 = vadd.f32 0.0, %v495
    %v497 = vpop.f32.mrb[0].mxu0
    %v498 = vadd.f32 0.0, %v497
    %499 = vdwg.mxu0
    %500 = vmatprep.subr.mxu0 %v344
    %501 = vmatpush1.msra.mxu0 %v343
    %502 = vmatprep.subr.mxu0 %v346
    %503 = vmatpush1.msra.mxu0 %v345
    %504 = vmatprep.subr.mxu0 %v348
    %505 = vmatpush1.msra.mxu0 %v347
    %506 = vmatprep.subr.mxu0 %v350
    %507 = vmatpush1.msra.mxu0 %v349
    %508 = vmatprep.subr.mxu0 %v352
    %509 = vmatpush1.msra.mxu0 %v351
    %510 = vmatprep.subr.mxu0 %v354
    %511 = vmatpush1.msra.mxu0 %v353
    %512 = vmatprep.subr.mxu0 %v356
    %513 = vmatpush1.msra.mxu0 %v355
    %514 = vmatprep.subr.mxu0 %v358
    %515 = vmatpush1.msra.mxu0 %v357
    %516 = vmatprep.subr.mxu0 %v360
    %517 = vmatpush1.msra.mxu0 %v359
    %518 = vmatprep.subr.mxu0 %v362
    %519 = vmatpush1.msra.mxu0 %v361
    %520 = vmatprep.subr.mxu0 %v364
    %521 = vmatpush1.msra.mxu0 %v363
    %522 = vmatprep.subr.mxu0 %v366
    %523 = vmatpush1.msra.mxu0 %v365
    %524 = vmatprep.subr.mxu0 %v368
    %525 = vmatpush1.msra.mxu0 %v367
    %526 = vmatprep.subr.mxu0 %v370
    %527 = vmatpush1.msra.mxu0 %v369
    %528 = vmatprep.subr.mxu0 %v372
    %529 = vmatpush1.msra.mxu0 %v371
    %530 = vmatprep.subr.mxu0 %v374
    %531 = vmatpush1.msra.mxu0 %v373
    %532 = vmatprep.subr.mxu0 0.0
    %533 = vmatpush1.msra.mxu0 0.0
    %534 = vmatprep.subr.mxu0 0.0
    %535 = vmatpush1.msra.mxu0 0.0
    %536 = vmatprep.subr.mxu0 0.0
    %537 = vmatpush1.msra.mxu0 0.0
    %538 = vmatprep.subr.mxu0 0.0
    %539 = vmatpush1.msra.mxu0 0.0
    %540 = vmatprep.subr.mxu0 0.0
    %541 = vmatpush1.msra.mxu0 0.0
    %542 = vmatprep.subr.mxu0 0.0
    %543 = vmatpush1.msra.mxu0 0.0
    %544 = vmatprep.subr.mxu0 0.0
    %545 = vmatpush1.msra.mxu0 0.0
    %546 = vmatprep.subr.mxu0 0.0
    %547 = vmatpush1.msra.mxu0 0.0
    %548 = vmatprep.subr.mxu0 0.0
    %549 = vmatpush1.msra.mxu0 0.0
    %550 = vmatprep.subr.mxu0 0.0
    %551 = vmatpush1.msra.mxu0 0.0
    %552 = vmatprep.subr.mxu0 0.0
    %553 = vmatpush1.msra.mxu0 0.0
    %554 = vmatprep.subr.mxu0 0.0
    %555 = vmatpush1.msra.mxu0 0.0
    %556 = vmatprep.subr.mxu0 0.0
    %557 = vmatpush1.msra.mxu0 0.0
    %558 = vmatprep.subr.mxu0 0.0
    %559 = vmatpush1.msra.mxu0 0.0
    %560 = vmatprep.subr.mxu0 0.0
    %561 = vmatpush1.msra.mxu0 0.0
    %562 = vmatprep.subr.mxu0 0.0
    %563 = vmatpush1.msra.mxu0 0.0
    %564 = vmatprep.mubr.f32.mxu0 0.0
    %565 = vmatmul.mubr.f32.gmra.mrb[0].mxu0 %v339
    %v566 = vpop.f32.mrb[0].mxu0
    %v567 = vadd.f32 %v478, %v566
    %v568 = vpop.f32.mrb[0].mxu0
    %v569 = vadd.f32 %v480, %v568
    %570 = vmatprep.mubr.f32.mxu0 0.0
    %571 = vmatmul.mubr.f32.gmra.mrb[0].mxu0 %v340
    %v572 = vpop.f32.mrb[0].mxu0
    %v573 = vadd.f32 %v484, %v572
    %v574 = vpop.f32.mrb[0].mxu0
    %v575 = vadd.f32 %v486, %v574
    %576 = vmatprep.mubr.f32.mxu0 0.0
    %577 = vmatmul.mubr.f32.gmra.mrb[0].mxu0 %v341
    %v578 = vpop.f32.mrb[0].mxu0
    %v579 = vadd.f32 %v490, %v578
    %v580 = vpop.f32.mrb[0].mxu0
    %v581 = vadd.f32 %v492, %v580
    %582 = vmatprep.mubr.f32.mxu0 0.0
    %583 = vmatmul.mubr.f32.gmra.mrb[0].mxu0 %v342
    %v584 = vpop.f32.mrb[0].mxu0
    %v585 = vadd.f32 %v496, %v584
    %v586 = vpop.f32.mrb[0].mxu0
    %v587 = vadd.f32 %v498, %v586
    %588 = vdwg.mxu0
    %v589 = vld [vmem:[%s5] sm:$0x3]
    %v591 = vlaneseq
    %v592 = vshrl.u32 %v591, 7
    %v593 = vsub.s32 0, %v592
    %v594 = vrot.slane %v589, %v593
    %v595 = vlaneseq
    %v596 = vshrl.u32 %v595, 7
    %v597 = vsub.s32 1, %v596
    %v598 = vrot.slane %v589, %v597
    %v601 = vadd.f32 %v567, %v594
    %v602 = vadd.f32 %v569, %v598
    %v603 = vadd.f32 %v573, %v594
    %v604 = vadd.f32 %v575, %v598
    %v605 = vadd.f32 %v579, %v594
    %v606 = vadd.f32 %v581, %v598
    %v607 = vadd.f32 %v585, %v594
    %v608 = vadd.f32 %v587, %v598
    %v609 = vmax.f32 %v601, %v603
    %v610 = vrot.slane %v609, 4
    %v611 = vmax.f32 %v609, %v610
    %v612 = vrot.slane %v611, 2
    %v613 = vmax.f32 %v611, %v612
    %v614 = vrot.slane %v613, 1
    %v615 = vmax.f32 %v613, %v614
    %v616 = vmax.f32 %v602, %v604
    %v617 = vrot.slane %v616, 4
    %v618 = vmax.f32 %v616, %v617
    %v619 = vrot.slane %v618, 2
    %v620 = vmax.f32 %v618, %v619
    %v621 = vrot.slane %v620, 1
    %v622 = vmax.f32 %v620, %v621
    %v623 = vmax.f32 %v605, %v607
    %v624 = vrot.slane %v623, 4
    %v625 = vmax.f32 %v623, %v624
    %v626 = vrot.slane %v625, 2
    %v627 = vmax.f32 %v625, %v626
    %v628 = vrot.slane %v627, 1
    %v629 = vmax.f32 %v627, %v628
    %v630 = vmax.f32 %v606, %v608
    %v631 = vrot.slane %v630, 4
    %v632 = vmax.f32 %v630, %v631
    %v633 = vrot.slane %v632, 2
    %v634 = vmax.f32 %v632, %v633
    %v635 = vrot.slane %v634, 1
    %v636 = vmax.f32 %v634, %v635
    %v637 = vsub.f32 %v601, %v615
    %v638 = vsub.f32 %v602, %v622
    %v639 = vsub.f32 %v603, %v615
    %v640 = vsub.f32 %v604, %v622
    %v641 = vsub.f32 %v605, %v629
    %v642 = vsub.f32 %v606, %v636
    %v643 = vsub.f32 %v607, %v629
    %v644 = vsub.f32 %v608, %v636
    %v645 = vmul.f32 %v637, 1.442695
    %v646 = vpow.pop %v645
    %v647 = vmul.f32 %v638, 1.442695
    %v648 = vpow.pop %v647
    %v649 = vmul.f32 %v639, 1.442695
    %v650 = vpow.pop %v649
    %v651 = vmul.f32 %v640, 1.442695
    %v652 = vpow.pop %v651
    %v653 = vmul.f32 %v641, 1.442695
    %v654 = vpow.pop %v653
    %v655 = vmul.f32 %v642, 1.442695
    %v656 = vpow.pop %v655
    %v657 = vmul.f32 %v643, 1.442695
    %v658 = vpow.pop %v657
    %v659 = vmul.f32 %v644, 1.442695
    %v660 = vpow.pop %v659
    %v661 = vadd.f32 %v646, %v650
    %v662 = vrot.slane %v661, 4
    %v663 = vadd.f32 %v661, %v662
    %v664 = vrot.slane %v663, 2
    %v665 = vadd.f32 %v663, %v664
    %v666 = vrot.slane %v665, 1
    %v667 = vadd.f32 %v665, %v666
    %v668 = vadd.f32 %v648, %v652
    %v669 = vrot.slane %v668, 4
    %v670 = vadd.f32 %v668, %v669
    %v671 = vrot.slane %v670, 2
    %v672 = vadd.f32 %v670, %v671
    %v673 = vrot.slane %v672, 1
    %v674 = vadd.f32 %v672, %v673
    %v675 = vadd.f32 %v654, %v658
    %v676 = vrot.slane %v675, 4
    %v677 = vadd.f32 %v675, %v676
    %v678 = vrot.slane %v677, 2
    %v679 = vadd.f32 %v677, %v678
    %v680 = vrot.slane %v679, 1
    %v681 = vadd.f32 %v679, %v680
    %v682 = vadd.f32 %v656, %v660
    %v683 = vrot.slane %v682, 4
    %v684 = vadd.f32 %v682, %v683
    %v685 = vrot.slane %v684, 2
    %v686 = vadd.f32 %v684, %v685
    %v687 = vrot.slane %v686, 1
    %v688 = vadd.f32 %v686, %v687
    %v689 = vrcp.pop %v667
    %v690 = vrcp.pop %v674
    %v691 = vrcp.pop %v681
    %v692 = vrcp.pop %v688
    %v693 = vmul.f32 %v646, %v689
    %v694 = vmul.f32 %v648, %v690
    %v695 = vmul.f32 %v650, %v689
    %v696 = vmul.f32 %v652, %v690
    %v697 = vmul.f32 %v654, %v691
    %v698 = vmul.f32 %v656, %v692
    %v699 = vmul.f32 %v658, %v691
    %v700 = vmul.f32 %v660, %v692
    %v701 = vld [vmem:[#allocation4] sm:$0xff]
    %v702 = vld [vmem:[#allocation4 + $0x8] sm:$0xff]
    %v703 = vld [vmem:[#allocation4 + $0x10] sm:$0xff]
    %v704 = vld [vmem:[#allocation4 + $0x18] sm:$0xff]
    %v705 = vld [vmem:[#allocation13] sm:$0xff]
    %v706 = vld [vmem:[#allocation13 + $0x8] sm:$0xff]
    %v707 = vld [vmem:[#allocation13 + $0x10] sm:$0xff]
    %v708 = vld [vmem:[#allocation13 + $0x18] sm:$0xff]
    %v709 = vld [vmem:[#allocation13 + $0x20] sm:$0xff]
    %v710 = vld [vmem:[#allocation13 + $0x28] sm:$0xff]
    %v711 = vld [vmem:[#allocation13 + $0x30] sm:$0xff]
    %v712 = vld [vmem:[#allocation13 + $0x38] sm:$0xff]
    %v713 = vld [vmem:[#allocation13 + $0x40] sm:$0xff]
    %v714 = vld [vmem:[#allocation13 + $0x48] sm:$0xff]
    %v715 = vld [vmem:[#allocation13 + $0x50] sm:$0xff]
    %v716 = vld [vmem:[#allocation13 + $0x58] sm:$0xff]
    %v717 = vld [vmem:[#allocation13 + $0x60] sm:$0xff]
    %v718 = vld [vmem:[#allocation13 + $0x68] sm:$0xff]
    %v719 = vld [vmem:[#allocation13 + $0x70] sm:$0xff]
    %v720 = vld [vmem:[#allocation13 + $0x78] sm:$0xff]
    %vm721 = vcmask 523264
    %v723 = vsel %vm721, %v701, 0
    %v726 = vsel %vm721, %v702, 0
    %v729 = vsel %vm721, %v703, 0
    %v732 = vsel %vm721, %v704, 0
    %734 = vmatprep.subr.mxu0 %v706
    %735 = vmatpush1.msra.mxu0 %v705
    %736 = vmatprep.subr.mxu0 %v708
    %737 = vmatpush1.msra.mxu0 %v707
    %738 = vmatprep.subr.mxu0 %v710
    %739 = vmatpush1.msra.mxu0 %v709
    %740 = vmatprep.subr.mxu0 %v712
    %741 = vmatpush1.msra.mxu0 %v711
    %742 = vmatprep.subr.mxu0 %v714
    %743 = vmatpush1.msra.mxu0 %v713
    %744 = vmatprep.subr.mxu0 %v716
    %745 = vmatpush1.msra.mxu0 %v715
    %746 = vmatprep.subr.mxu0 %v718
    %747 = vmatpush1.msra.mxu0 %v717
    %748 = vmatprep.subr.mxu0 %v720
    %749 = vmatpush1.msra.mxu0 %v719
    %750 = vmatprep.subr.mxu0 0.0
    %751 = vmatpush1.msra.mxu0 0.0
    %752 = vmatprep.subr.mxu0 0.0
    %753 = vmatpush1.msra.mxu0 0.0
    %754 = vmatprep.subr.mxu0 0.0
    %755 = vmatpush1.msra.mxu0 0.0
    %756 = vmatprep.subr.mxu0 0.0
    %757 = vmatpush1.msra.mxu0 0.0
    %758 = vmatprep.subr.mxu0 0.0
    %759 = vmatpush1.msra.mxu0 0.0
    %760 = vmatprep.subr.mxu0 0.0
    %761 = vmatpush1.msra.mxu0 0.0
    %762 = vmatprep.subr.mxu0 0.0
    %763 = vmatpush1.msra.mxu0 0.0
    %764 = vmatprep.subr.mxu0 0.0
    %765 = vmatpush1.msra.mxu0 0.0
    %766 = vmatprep.subr.mxu0 0.0
    %767 = vmatpush1.msra.mxu0 0.0
    %768 = vmatprep.subr.mxu0 0.0
    %769 = vmatpush1.msra.mxu0 0.0
    %770 = vmatprep.subr.mxu0 0.0
    %771 = vmatpush1.msra.mxu0 0.0
    %772 = vmatprep.subr.mxu0 0.0
    %773 = vmatpush1.msra.mxu0 0.0
    %774 = vmatprep.subr.mxu0 0.0
    %775 = vmatpush1.msra.mxu0 0.0
    %776 = vmatprep.subr.mxu0 0.0
    %777 = vmatpush1.msra.mxu0 0.0
    %778 = vmatprep.subr.mxu0 0.0
    %779 = vmatpush1.msra.mxu0 0.0
    %780 = vmatprep.subr.mxu0 0.0
    %781 = vmatpush1.msra.mxu0 0.0
    %782 = vmatprep.subr.mxu0 0.0
    %783 = vmatpush1.msra.mxu0 0.0
    %784 = vmatprep.subr.mxu0 0.0
    %785 = vmatpush1.msra.mxu0 0.0
    %786 = vmatprep.subr.mxu0 0.0
    %787 = vmatpush1.msra.mxu0 0.0
    %788 = vmatprep.subr.mxu0 0.0
    %789 = vmatpush1.msra.mxu0 0.0
    %790 = vmatprep.subr.mxu0 0.0
    %791 = vmatpush1.msra.mxu0 0.0
    %792 = vmatprep.subr.mxu0 0.0
    %793 = vmatpush1.msra.mxu0 0.0
    %794 = vmatprep.subr.mxu0 0.0
    %795 = vmatpush1.msra.mxu0 0.0
    %796 = vmatprep.subr.mxu0 0.0
    %797 = vmatpush1.msra.mxu0 0.0
    %798 = vmatprep.mubr.f32.mxu0 0.0
    %799 = vmatmul.mubr.f32.gmra.mrb[0].mxu0 %v723
    %v800 = vpop.f32.mrb[0].mxu0
    %v801 = vadd.f32 0.0, %v800
    %v802 = vpop.f32.mrb[0].mxu0
    %v803 = vadd.f32 0.0, %v802
    %804 = vmatprep.mubr.f32.mxu0 0.0
    %805 = vmatmul.mubr.f32.gmra.mrb[0].mxu0 %v726
    %v806 = vpop.f32.mrb[0].mxu0
    %v807 = vadd.f32 0.0, %v806
    %v808 = vpop.f32.mrb[0].mxu0
    %v809 = vadd.f32 0.0, %v808
    %810 = vmatprep.mubr.f32.mxu0 0.0
    %811 = vmatmul.mubr.f32.gmra.mrb[0].mxu0 %v729
    %v812 = vpop.f32.mrb[0].mxu0
    %v813 = vadd.f32 0.0, %v812
    %v814 = vpop.f32.mrb[0].mxu0
    %v815 = vadd.f32 0.0, %v814
    %816 = vmatprep.mubr.f32.mxu0 0.0
    %817 = vmatmul.mubr.f32.gmra.mrb[0].mxu0 %v732
    %v818 = vpop.f32.mrb[0].mxu0
    %v819 = vadd.f32 0.0, %v818
    %v820 = vpop.f32.mrb[0].mxu0
    %v821 = vadd.f32 0.0, %v820
    %822 = vdwg.mxu0
    %v823 = vmul.f32 %v693, %v801
    %v824 = vmul.f32 %v694, %v803
    %v825 = vmul.f32 %v695, %v807
    %v826 = vmul.f32 %v696, %v809
    %v827 = vmul.f32 %v697, %v813
    %v828 = vmul.f32 %v698, %v815
    %v829 = vmul.f32 %v699, %v819
    %v830 = vmul.f32 %v700, %v821
    %v831 = vadd.f32 %v823, %v825
    %v832 = vrot.slane %v831, 4
    %v833 = vadd.f32 %v831, %v832
    %v834 = vrot.slane %v833, 2
    %v835 = vadd.f32 %v833, %v834
    %v836 = vrot.slane %v835, 1
    %v837 = vadd.f32 %v835, %v836
    %v838 = vadd.f32 %v824, %v826
    %v839 = vrot.slane %v838, 4
    %v840 = vadd.f32 %v838, %v839
    %v841 = vrot.slane %v840, 2
    %v842 = vadd.f32 %v840, %v841
    %v843 = vrot.slane %v842, 1
    %v844 = vadd.f32 %v842, %v843
    %v845 = vadd.f32 %v827, %v829
    %v846 = vrot.slane %v845, 4
    %v847 = vadd.f32 %v845, %v846
    %v848 = vrot.slane %v847, 2
    %v849 = vadd.f32 %v847, %v848
    %v850 = vrot.slane %v849, 1
    %v851 = vadd.f32 %v849, %v850
    %v852 = vadd.f32 %v828, %v830
    %v853 = vrot.slane %v852, 4
    %v854 = vadd.f32 %v852, %v853
    %v855 = vrot.slane %v854, 2
    %v856 = vadd.f32 %v854, %v855
    %v857 = vrot.slane %v856, 1
    %v858 = vadd.f32 %v856, %v857
    %v859 = vld [vmem:[%s7] sm:$0x3]
    %v861 = vlaneseq
    %v862 = vshrl.u32 %v861, 7
    %v863 = vsub.s32 0, %v862
    %v864 = vrot.slane %v859, %v863
    %v865 = vlaneseq
    %v866 = vshrl.u32 %v865, 7
    %v867 = vsub.s32 1, %v866
    %v868 = vrot.slane %v859, %v867
    %v871 = vadd.f32 %v837, %v864
    %v872 = vadd.f32 %v844, %v868
    %v873 = vadd.f32 %v851, %v864
    %v874 = vadd.f32 %v858, %v868
    %v879 = vcombine.low %v871, %v872
    %v881 = vunpack.c.l.s4 1983009808
    %v882 = vunpack.c.0.s8 %v881
    %v883 = vlaneseq
    %v884 = vshrl.u32 %v883, 7
    %v885 = vsub.s32 %v882, %v884
    %v886 = vrot.slane %v879, %v885
    %v887 = vcombine.low %v873, %v874
    %v889 = vunpack.c.l.s4 1983009808
    %v890 = vunpack.c.0.s8 %v889
    %v891 = vlaneseq
    %v892 = vshrl.u32 %v891, 7
    %v893 = vsub.s32 %v890, %v892
    %v894 = vrot.slane %v887, %v893
    %vm895 = vcmask 1044484
    %v896 = vsel %vm895, %v886, %v886
    %vm897 = vcmask 1046534
    %v898 = vsel %vm897, %v886, %v896
    %v899 = vrot.slane %v894, 7
    %vm900 = vcmask 1041409
    %v901 = vsel %vm900, %v899, %v898
    %vm902 = vcmask 1043459
    %v903 = vsel %vm902, %v899, %v901
    %vm904 = vcmask 1045509
    %v905 = vsel %vm904, %v899, %v903
    %vm906 = vcmask 1047559
    %v907 = vsel %vm906, %v899, %v905
    %909 = vst [vmem:[#allocation15] sm:$0xf] %v907
    // Predicated region
    $region62: #{tpu_custom_call.1} parent=1 // pred_check
      _
    $region63: #{tpu_custom_call.1} parent=1 // pred_check_branch
      %911 = sbr.rel (0) target = $region65
    $region64: #{tpu_custom_call.1} parent=1 // pred_region
      %s913 = ssub.s32 64, 64
      %914 = vsyncadd [#allocation6], %s913
      %s916 = sshll.u32 [#allocation15], 4
      %s917 = int_to_ptr.vmem [resolvable:$true] %s916
      %919 = dma.vmem_to_hbm [thread:$0]  %s917, 64, %s8, [#allocation6]
    $region65: #{tpu_custom_call.1} parent=1 // pred_fallthru
      _
    // Predicated region
    $region66: #{tpu_custom_call.1} parent=1 // pred_check
      _
    $region67: #{tpu_custom_call.1} parent=1 // pred_check_branch
      %921 = sbr.rel (0) target = $region69
    $region68: #{tpu_custom_call.1} parent=1 // pred_region
      %922 = dma.done [#allocation6], 64
    $region69: #{tpu_custom_call.1} parent=1 // pred_fallthru
      _
    %923 = vsyncpa [#allocation5], 1
    %924 = vsyncpa [#allocation8], 1
    %925 = vsyncpa [#allocation11], 1
    %926 = vsyncpa [#allocation14], 1
    %927 = vsyncpa [#allocation6], 1

</llo_original>
